<compile_context>
chip_gen: v7x
topology: tpu7x:2x2x1
jax: 0.10.0
libtpu: 0.0.40
codegen_flags: <defaults>
</compile_context>

<pallas_src>
import functools

import jax
import jax.numpy as jnp
from jax.experimental import pallas as pl
from jax.experimental.pallas import tpu as pltpu

_LANES = 128                 # lane width
_TM = 8192                   # rows per block: 8192*128*4 B = 4 MiB per f32 block
_P = 2                       # leading "parallel" grid axis (both TCs on v7x)
_VMEM_LIMIT = 48 * 1024 * 1024


def _round_up(x, m):
    return ((x + m - 1) // m) * m


def _bce_ll_kernel(x_ref, t_ref, out_ref, *, rows, inner_blocks, block_rows,
                   hard_targets):
    """Accumulate the clamped log-likelihood sum of one (block_rows, 128) tile.

    The negation and the 1/n mean scaling happen once, outside the kernel.
    """
    p_idx = pl.program_id(0)
    k = pl.program_id(1)

    # Output block is VMEM-resident across the k (reduction) axis: use it
    # directly as the (1, 8, 128) accumulator.
    @pl.when(k == 0)
    def _():
        out_ref[...] = jnp.zeros_like(out_ref)

    x = x_ref[...].astype(jnp.float32)
    t = t_ref[...].astype(jnp.float32)

    if hard_targets:
        # Exact only for hard 0/1 labels: a single transcendental per element.
        q = jnp.where(t > 0.5, x, 1.0 - x)
        ll = jnp.maximum(jnp.log(q), jnp.float32(-100.0))
    else:
        # PyTorch's binary_cross_entropy clamps each log term at -100.
        #   t*log(p) + (1-t)*log(1-p) == log(1-p) + t*(log(p) - log(1-p))
        log_p = jnp.maximum(jnp.log(x), jnp.float32(-100.0))
        log_1mp = jnp.maximum(jnp.log1p(-x), jnp.float32(-100.0))
        ll = log_1mp + t * (log_p - log_1mp)

    base_row = (p_idx * inner_blocks + k) * block_rows

    def _accumulate(vals):
        # Keep the reduction vreg-shaped: pure VPU adds, no per-step cross-lane
        # reduce and no per-step scalar store.
        out_ref[...] += vals.reshape(-1, 8, _LANES).sum(axis=0)[None]

    # The row mask is only needed for blocks that overhang the logical end
    # (the boundary block and any clamped duplicate block from the parallel
    # split); full interior blocks skip the iota/compare/select entirely.
    @pl.when(base_row + block_rows > rows)
    def _():
        row_ids = base_row + jax.lax.broadcasted_iota(jnp.int32, ll.shape, 0)
        # jnp.where is a true select, so NaN/Inf computed from unspecified
        # out-of-bounds rows never reaches the accumulator.
        _accumulate(jnp.where(row_ids < rows, ll, 0.0))

    @pl.when(base_row + block_rows <= rows)
    def _():
        _accumulate(ll)


def _center_crop(target, out_shape):
    """crop_tensor: center-crop target down to out_shape (same rank)."""
    assert target.ndim == len(out_shape)
    if tuple(target.shape) == tuple(out_shape):
        return target                       # no crop -> no slice, no copy
    starts = []
    for ts, os_ in zip(target.shape, out_shape):
        assert ts >= os_, "target must be at least as large as input"
        starts.append((ts - os_) // 2)
    return target[tuple(slice(s, s + o) for s, o in zip(starts, out_shape))]


def _ll_clamped(p, t):
    """Plain-JAX clamped log-likelihood (used only for the <128-element tail)."""
    p = p.astype(jnp.float32)
    t = t.astype(jnp.float32)
    log_p = jnp.maximum(jnp.log(p), -100.0)
    log_1mp = jnp.maximum(jnp.log1p(-p), -100.0)
    return log_1mp + t * (log_p - log_1mp)


def bce_loss(inputs, target, *, hard_targets=None):
    """Mean binary cross entropy between inputs (probabilities) and target.

    inputs:  (N, 1, D, H, W) probabilities in (0, 1)
    target:  (N, 1, D', H', W') with D' >= D etc.; center-cropped to inputs.
    hard_targets: None -> auto (True for bool/integer targets); True is exact
                  only for strictly-0/1 labels.
    Returns scalar float32 loss.
    """
    ishape = inputs.shape
    tshape = target.shape
    assert ishape[:2] == tshape[:2]
    assert ishape[1] == 1, "Only supports a single channel for now"

    # TODO(synk): the center crop is still a plain-JAX strided slice (one extra
    # HBM pass over the cropped target when a crop is actually needed).  Fusing
    # it into the kernel needs either unaligned Element-offset BlockSpecs or a
    # manual strided DMA of (d, H, W) windows, and with W < 128 that also
    # forces a narrow-lane compute layout, so it is only a clear win for
    # lane-friendly W; kept on the safe plain-JAX path here.
    target = _center_crop(target, ishape)

    # Hard 0/1 labels (bool / integer dtype) only need one log per element.
    if hard_targets is None:
        hard_targets = (target.dtype == jnp.bool_
                        or jnp.issubdtype(target.dtype, jnp.integer))
    if target.dtype == jnp.bool_:
        target = target.astype(jnp.int8)     # still streams at 1 B/element

    n = 1
    for d in ishape:
        n *= d

    # Flat views (free: both arrays are contiguous).  No dtype cast here — the
    # target streams from HBM in its narrow native dtype and is up-converted
    # inside the kernel.
    x = inputs.reshape(-1)
    t = target.reshape(-1)

    rows = n // _LANES           # full 128-lane groups handled by the kernel
    rem = n - rows * _LANES      # <128 trailing elements handled in plain JAX

    tail_ll = jnp.float32(0.0)
    if rem:
        # Tiny tail folded in with plain JAX instead of padding/concatenating
        # the whole array through HBM.
        tail_ll = jnp.sum(_ll_clamped(x[rows * _LANES:], t[rows * _LANES:]))

    main_ll = jnp.float32(0.0)
    if rows:
        x2 = x[: rows * _LANES].reshape(rows, _LANES)
        t2 = t[: rows * _LANES].reshape(rows, _LANES)

        # Large streaming tile, shrunk for small inputs; sub-32-bit operands
        # round the block up to the (32, 128) native tile.
        min_rows = 32 if min(x2.dtype.itemsize, t2.dtype.itemsize) < 4 else 8
        tm = min(_TM, _round_up(rows, min_rows))
        nblocks = -(-rows // tm)                     # ceil
        num_par = _P if nblocks >= _P else 1
        inner = -(-nblocks // num_par)               # ceil

        def idx_map(p, k):
            # Clamp so the DMA never targets a fully out-of-bounds block; the
            # in-kernel row mask zeroes any duplicated contribution.
            return (jnp.minimum(p * inner + k, nblocks - 1), 0)

        kernel = functools.partial(
            _bce_ll_kernel,
            rows=rows, inner_blocks=inner, block_rows=tm,
            hard_targets=bool(hard_targets),
        )

        cost = pl.CostEstimate(
            flops=8 * rows * _LANES,
            transcendentals=(1 if hard_targets else 2) * rows * _LANES,
            bytes_accessed=(x2.size * x2.dtype.itemsize
                            + t2.size * t2.dtype.itemsize
                            + num_par * 8 * _LANES * 4),
        )

        partials = pl.pallas_call(
            kernel,
            out_shape=jax.ShapeDtypeStruct((num_par, 8, _LANES), jnp.float32),
            grid_spec=pltpu.PrefetchScalarGridSpec(
                num_scalar_prefetch=0,
                grid=(num_par, inner),
                in_specs=[
                    pl.BlockSpec((tm, _LANES), idx_map),
                    pl.BlockSpec((tm, _LANES), idx_map),
                ],
                out_specs=pl.BlockSpec((1, 8, _LANES), lambda p, k: (p, 0, 0)),
            ),
            compiler_params=pltpu.CompilerParams(
                dimension_semantics=("parallel", "arbitrary"),
                vmem_limit_bytes=_VMEM_LIMIT,
            ),
            cost_estimate=cost,
        )(x2, t2)

        main_ll = jnp.sum(partials)

    # Single cross-lane / cross-core collapse, one negation, one 1/n scale.
    return -(main_ll + tail_ll) / jnp.float32(n)


def _bce_loss_ref(inputs, target):
    target = _center_crop(target, inputs.shape)
    p = inputs.astype(jnp.float32)
    t = target.astype(jnp.float32)
    log_p = jnp.maximum(jnp.log(p), -100.0)
    log_1mp = jnp.maximum(jnp.log1p(-p), -100.0)
    return jnp.mean(-(t * log_p + (1.0 - t) * log_1mp))


if __name__ == "__main__":
    key = jax.random.PRNGKey(0)
    k1, k2, k3, k4, k5 = jax.random.split(key, 5)

    # (a) soft float targets, spatially larger target -> center crop; n % 128 == 0.
    inp_a = jax.nn.sigmoid(
        jax.random.normal(k1, (2, 1, 8, 16, 16), dtype=jnp.float32))
    tgt_a = (jax.random.uniform(k2, (2, 1, 12, 20, 20)) > 0.5).astype(jnp.float32)
    out_a = jax.block_until_ready(bce_loss(inp_a, tgt_a))
    ref_a = _bce_loss_ref(inp_a, tgt_a)
    assert jnp.allclose(out_a, ref_a, rtol=1e-5, atol=1e-5), (out_a, ref_a)

    # (b) hard integer labels: narrow 1 B/elem streaming + single-log path.
    tgt_b = (jax.random.uniform(k3, (2, 1, 12, 20, 20)) > 0.5).astype(jnp.int8)
    out_b = jax.block_until_ready(bce_loss(inp_a, tgt_b))
    ref_b = _bce_loss_ref(inp_a, tgt_b)
    assert jnp.allclose(out_b, ref_b, rtol=1e-5, atol=1e-5), (out_b, ref_b)

    # (c) n % 128 != 0: ragged tail handled without padding / concatenation.
    inp_c = jax.nn.sigmoid(
        jax.random.normal(k4, (1, 1, 5, 16, 17), dtype=jnp.float32))
    tgt_c = (jax.random.uniform(k5, (1, 1, 7, 18, 19)) > 0.5).astype(jnp.float32)
    out_c = jax.block_until_ready(bce_loss(inp_c, tgt_c))
    ref_c = _bce_loss_ref(inp_c, tgt_c)
    assert jnp.allclose(out_c, ref_c, rtol=1e-5, atol=1e-5), (out_c, ref_c)

    print("KERNEL_OK")
</pallas_src>

<mosaic_0001>
module attributes {stable_mosaic.version = 11 : i64} {
  func.func @_bce_ll_kernel(%arg0: i32, %arg1: i32, %arg2: memref<32x128xf32, #tpu.memory_space<vmem>>, %arg3: memref<32x128xf32, #tpu.memory_space<vmem>>, %arg4: memref<1x8x128xf32, #tpu.memory_space<vmem>>) attributes {dimension_semantics = [#tpu.dimension_semantics<parallel>, #tpu.dimension_semantics<arbitrary>], iteration_bounds = array<i64: 1, 1>, scalar_prefetch = 0 : i64, scratch_operands = 0 : i64, tpu.core_type = #tpu.core_type<tc>, window_params = [{transform_indices = @transform_0, window_bounds = array<i64: 32, 128>}, {transform_indices = @transform_1, window_bounds = array<i64: 32, 128>}, {transform_indices = @transform_2, window_bounds = array<i64: 1, 8, 128>}]} {
    %c0_i32 = arith.constant 0 : i32
    %0 = arith.cmpi eq, %arg1, %c0_i32 : i32
    %1 = arith.extui %0 : i1 to i32
    %c0_i32_0 = arith.constant 0 : i32
    %2 = arith.cmpi ne, %1, %c0_i32_0 : i32
    scf.if %2 {
      %cst_12 = arith.constant 0.000000e+00 : f32
      %27 = vector.broadcast %cst_12 : f32 to vector<1x8x128xf32>
      %c0_13 = arith.constant 0 : index
      %c0_14 = arith.constant 0 : index
      %c0_15 = arith.constant 0 : index
      %28 = vector.load %arg4[%c0_13, %c0_14, %c0_15] : memref<1x8x128xf32, #tpu.memory_space<vmem>>, vector<1x8x128xf32>
      tpu.vector_store %arg4[%c0_13, %c0_14, %c0_15], %27 {strides = array<i32>} : memref<1x8x128xf32, #tpu.memory_space<vmem>>, vector<1x8x128xf32>,
    } else {
    }
    %c0 = arith.constant 0 : index
    %c0_1 = arith.constant 0 : index
    %3 = vector.load %arg2[%c0, %c0_1] : memref<32x128xf32, #tpu.memory_space<vmem>>, vector<32x128xf32>
    %c0_2 = arith.constant 0 : index
    %c0_3 = arith.constant 0 : index
    %4 = vector.load %arg3[%c0_2, %c0_3] : memref<32x128xf32, #tpu.memory_space<vmem>>, vector<32x128xf32>
    %5 = math.log %3 : vector<32x128xf32>
    %cst = arith.constant -1.000000e+02 : f32
    %6 = vector.broadcast %cst : f32 to vector<32x128xf32>
    %7 = arith.maximumf %5, %6 : vector<32x128xf32>
    %cst_4 = arith.constant 0.000000e+00 : f32
    %8 = vector.broadcast %cst_4 : f32 to vector<32x128xf32>
    %9 = arith.subf %8, %3 : vector<32x128xf32>
    %10 = math.log1p %9 : vector<32x128xf32>
    %cst_5 = arith.constant -1.000000e+02 : f32
    %11 = vector.broadcast %cst_5 : f32 to vector<32x128xf32>
    %12 = arith.maximumf %10, %11 : vector<32x128xf32>
    %13 = arith.subf %7, %12 : vector<32x128xf32>
    %14 = arith.mulf %4, %13 : vector<32x128xf32>
    %15 = arith.addf %12, %14 : vector<32x128xf32>
    %c1_i32 = arith.constant 1 : i32
    %16 = arith.muli %arg0, %c1_i32 : i32
    %17 = arith.addi %16, %arg1 : i32
    %c32_i32 = arith.constant 32 : i32
    %18 = arith.muli %17, %c32_i32 : i32
    %c32_i32_6 = arith.constant 32 : i32
    %19 = arith.addi %18, %c32_i32_6 : i32
    %c32_i32_7 = arith.constant 32 : i32
    %20 = arith.cmpi sgt, %19, %c32_i32_7 : i32
    %21 = arith.extui %20 : i1 to i32
    %c0_i32_8 = arith.constant 0 : i32
    %22 = arith.cmpi ne, %21, %c0_i32_8 : i32
    scf.if %22 {
      %27 = tpu.iota {dimensions = array<i32: 0>} : vector<32x128xi32>
      %28 = vector.broadcast %18 : i32 to vector<32x128xi32>
      %29 = arith.addi %28, %27 : vector<32x128xi32>
      %c32_i32_12 = arith.constant 32 : i32
      %30 = vector.broadcast %c32_i32_12 : i32 to vector<32x128xi32>
      %31 = arith.cmpi slt, %29, %30 : vector<32x128xi32>
      %cst_13 = arith.constant 0.000000e+00 : f32
      %32 = vector.broadcast %cst_13 : f32 to vector<32x128xf32>
      %33 = arith.select %31, %15, %32 : vector<32x128xi1>, vector<32x128xf32>
      %c0_14 = arith.constant 0 : index
      %c0_15 = arith.constant 0 : index
      %c0_16 = arith.constant 0 : index
      %34 = vector.load %arg4[%c0_14, %c0_15, %c0_16] : memref<1x8x128xf32, #tpu.memory_space<vmem>>, vector<1x8x128xf32>
      %35 = vector.shape_cast %33 : vector<32x128xf32> to vector<4x8x128xf32>
      %cst_17 = arith.constant dense<0.000000e+00> : vector<8x128xf32>
      %36 = vector.multi_reduction <add>, %35, %cst_17 [0] : vector<4x8x128xf32> to vector<8x128xf32>
      %37 = vector.shape_cast %36 : vector<8x128xf32> to vector<1x8x128xf32>
      %38 = arith.addf %34, %37 : vector<1x8x128xf32>
      %c0_18 = arith.constant 0 : index
      %c0_19 = arith.constant 0 : index
      %c0_20 = arith.constant 0 : index
      %39 = vector.load %arg4[%c0_18, %c0_19, %c0_20] : memref<1x8x128xf32, #tpu.memory_space<vmem>>, vector<1x8x128xf32>
      tpu.vector_store %arg4[%c0_18, %c0_19, %c0_20], %38 {strides = array<i32>} : memref<1x8x128xf32, #tpu.memory_space<vmem>>, vector<1x8x128xf32>,
    } else {
    }
    %c32_i32_9 = arith.constant 32 : i32
    %23 = arith.addi %18, %c32_i32_9 : i32
    %c32_i32_10 = arith.constant 32 : i32
    %24 = arith.cmpi sle, %23, %c32_i32_10 : i32
    %25 = arith.extui %24 : i1 to i32
    %c0_i32_11 = arith.constant 0 : i32
    %26 = arith.cmpi ne, %25, %c0_i32_11 : i32
    scf.if %26 {
      %c0_12 = arith.constant 0 : index
      %c0_13 = arith.constant 0 : index
      %c0_14 = arith.constant 0 : index
      %27 = vector.load %arg4[%c0_12, %c0_13, %c0_14] : memref<1x8x128xf32, #tpu.memory_space<vmem>>, vector<1x8x128xf32>
      %28 = vector.shape_cast %15 : vector<32x128xf32> to vector<4x8x128xf32>
      %cst_15 = arith.constant dense<0.000000e+00> : vector<8x128xf32>
      %29 = vector.multi_reduction <add>, %28, %cst_15 [0] : vector<4x8x128xf32> to vector<8x128xf32>
      %30 = vector.shape_cast %29 : vector<8x128xf32> to vector<1x8x128xf32>
      %31 = arith.addf %27, %30 : vector<1x8x128xf32>
      %c0_16 = arith.constant 0 : index
      %c0_17 = arith.constant 0 : index
      %c0_18 = arith.constant 0 : index
      %32 = vector.load %arg4[%c0_16, %c0_17, %c0_18] : memref<1x8x128xf32, #tpu.memory_space<vmem>>, vector<1x8x128xf32>
      tpu.vector_store %arg4[%c0_16, %c0_17, %c0_18], %31 {strides = array<i32>} : memref<1x8x128xf32, #tpu.memory_space<vmem>>, vector<1x8x128xf32>,
    } else {
    }
    return
  }
  func.func @transform_0(%arg0: i32, %arg1: i32) -> (i32, i32) {
    %c1_i32 = arith.constant 1 : i32
    %0 = arith.muli %arg0, %c1_i32 : i32
    %1 = arith.addi %0, %arg1 : i32
    %c0_i32 = arith.constant 0 : i32
    %2 = arith.minsi %1, %c0_i32 : i32
    %c0_i32_0 = arith.constant 0 : i32
    %c0_i32_1 = arith.constant 0 : i32
    return %2, %c0_i32_0 : i32, i32
  }
  func.func @transform_1(%arg0: i32, %arg1: i32) -> (i32, i32) {
    %c1_i32 = arith.constant 1 : i32
    %0 = arith.muli %arg0, %c1_i32 : i32
    %1 = arith.addi %0, %arg1 : i32
    %c0_i32 = arith.constant 0 : i32
    %2 = arith.minsi %1, %c0_i32 : i32
    %c0_i32_0 = arith.constant 0 : i32
    %c0_i32_1 = arith.constant 0 : i32
    return %2, %c0_i32_0 : i32, i32
  }
  func.func @transform_2(%arg0: i32, %arg1: i32) -> (i32, i32, i32) {
    %c0_i32 = arith.constant 0 : i32
    %c0_i32_0 = arith.constant 0 : i32
    %c0_i32_1 = arith.constant 0 : i32
    return %arg0, %c0_i32, %c0_i32_0 : i32, i32, i32
  }
}

</mosaic_0001>

<llo_original>
// kernel: tpu_custom_call.1
$region0: #{tpu_custom_call.1}
  #allocation0 [shape = 'u32[]', space=smem, size = 0x4, offset = 0x4, fixed_abs, tag = 'smem constant byte address 0x4 - core index']
  #allocation1 [shape = 'u32[144,128]{1,0:T(1,128)}', space=vmem, size = 0x12000, scoped, tag = 'internal scratch']
  %s0 = inlined_call_operand.hbm [shape: f32[32,128], index: 0, kind: input, shape index: {}]
  %s1 = inlined_call_operand.hbm [shape: f32[32,128], index: 1, kind: input, shape index: {}]
  %s2 = inlined_call_operand.hbm [shape: f32[1,8,128], index: 2, kind: output, shape index: {}]
  %s3 = sld [smem:[#allocation0]]
  $region38: #{tpu_custom_call.1} parent=0
    _
  %s5 = ssub.s32 1, %s3
  %s6 = scalar_select 0, %s5, %s3
  $region1: #{tpu_custom_call.1} parent=0
    #allocation2 [shape = 'u8[16384]{0}', space=vmem, size = 0x4000, scoped, tag = 'input window, operand 0, single buffered']
    #allocation3 [shape = 's32[1]{0}', space=sflag, size = 0x4, scoped, tag = 'scoped memory for tpu_custom_call.1']
    #allocation4 [shape = 's32[1]{0}', space=sflag, size = 0x4, scoped, tag = 'scoped memory for tpu_custom_call.1']
    #allocation5 [shape = 'u8[16384]{0}', space=vmem, size = 0x4000, scoped, tag = 'input window, operand 1, single buffered']
    #allocation6 [shape = 's32[1]{0}', space=sflag, size = 0x4, scoped, tag = 'scoped memory for tpu_custom_call.1']
    #allocation7 [shape = 'u8[4096]{0}', space=vmem, size = 0x1000, scoped, tag = 'output window, operand 0, single buffered']
    %7 = vsyncpa [#allocation3], 0
    %8 = vsyncpa [#allocation6], 0
    %9 = vsyncpa [#allocation4], 0
    // Predicated region
    $region2: #{tpu_custom_call.1} parent=1 // pred_check
      _
    $region3: #{tpu_custom_call.1} parent=1 // pred_check_branch
      %11 = sbr.rel (0) target = $region5
    $region4: #{tpu_custom_call.1} parent=1 // pred_region
      %s12 = sadd.s32 0, 0
      %p13 = scmp.lt.s32.totalorder %s12, 0
      %s14 = scalar_select %p13, %s12, 0
      %s15 = smul.u32 4, %s14
      %s17 = ssub.s32 512, 512
      %18 = vsyncadd [#allocation3], %s17
      %s19 = smul.addr %s15, 128
      %s20 = scalar_lea.hbm %s0, %s19
      %s21 = sshll.u32 [#allocation2], 4
      %s22 = int_to_ptr.vmem [resolvable:$true] %s21
      %27 = dma.hbm_to_vmem [thread:$0]  %s20, 512, %s22, [#allocation3], 128, 128, 8
    $region5: #{tpu_custom_call.1} parent=1 // pred_fallthru
      _
    // Predicated region
    $region6: #{tpu_custom_call.1} parent=1 // pred_check
      _
    $region7: #{tpu_custom_call.1} parent=1 // pred_check_branch
      %29 = sbr.rel (0) target = $region9
    $region8: #{tpu_custom_call.1} parent=1 // pred_region
      %s30 = sadd.s32 0, 0
      %p31 = scmp.lt.s32.totalorder %s30, 0
      %s32 = scalar_select %p31, %s30, 0
      %s33 = smul.u32 4, %s32
      %s35 = ssub.s32 512, 512
      %36 = vsyncadd [#allocation6], %s35
      %s37 = smul.addr %s33, 128
      %s38 = scalar_lea.hbm %s1, %s37
      %s39 = sshll.u32 [#allocation5], 4
      %s40 = int_to_ptr.vmem [resolvable:$true] %s39
      %45 = dma.hbm_to_vmem [thread:$0]  %s38, 512, %s40, [#allocation6], 128, 128, 8
    $region9: #{tpu_custom_call.1} parent=1 // pred_fallthru
      _
    // Predicated region
    $region10: #{tpu_custom_call.1} parent=1 // pred_check
      _
    $region11: #{tpu_custom_call.1} parent=1 // pred_check_branch
      %47 = sbr.rel (0) target = $region13
    $region12: #{tpu_custom_call.1} parent=1 // pred_region
      %48 = dma.done [#allocation3], 512
    $region13: #{tpu_custom_call.1} parent=1 // pred_fallthru
      _
    // Predicated region
    $region14: #{tpu_custom_call.1} parent=1 // pred_check
      _
    $region15: #{tpu_custom_call.1} parent=1 // pred_check_branch
      %50 = sbr.rel (0) target = $region17
    $region16: #{tpu_custom_call.1} parent=1 // pred_region
      %51 = dma.done [#allocation6], 512
    $region17: #{tpu_custom_call.1} parent=1 // pred_fallthru
      _
    %s52 = sadd.s32 0, 0
    %p53 = scmp.lt.s32.totalorder %s52, 0
    %s54 = scalar_select %p53, %s52, 0
    %s55 = smul.u32 4, %s54
    %s56 = sadd.s32 0, 0
    %p57 = scmp.lt.s32.totalorder %s56, 0
    %s58 = scalar_select %p57, %s56, 0
    %s59 = smul.u32 4, %s58
    %p60 = scmp.eq.s32.totalorder 0, 0
    // Predicated region
    $region18: #{tpu_custom_call.1} parent=1 // pred_check
      %p61 = pneg %p60
    $region19: #{tpu_custom_call.1} parent=1 // pred_check_branch
      %63 = sbr.rel (%p61) target = $region21
    $region20: #{tpu_custom_call.1} parent=1 // pred_region
      %64 = vst [vmem:[#allocation7] sm:$0xff] 0.0
    $region21: #{tpu_custom_call.1} parent=1 // pred_fallthru
      _
    %v65 = vld [vmem:[#allocation2] sm:$0xff]
    %v66 = vld [vmem:[#allocation2 + $0x8] sm:$0xff]
    %v67 = vld [vmem:[#allocation2 + $0x10] sm:$0xff]
    %v68 = vld [vmem:[#allocation2 + $0x18] sm:$0xff]
    %v69 = vld [vmem:[#allocation5] sm:$0xff]
    %v70 = vld [vmem:[#allocation5 + $0x8] sm:$0xff]
    %v71 = vld [vmem:[#allocation5 + $0x10] sm:$0xff]
    %v72 = vld [vmem:[#allocation5 + $0x18] sm:$0xff]
    %v73 = vlog2.pop %v65
    %v74 = vmul.f32 %v73, 0.6931472
    %v75 = vlog2.pop %v66
    %v76 = vmul.f32 %v75, 0.6931472
    %v77 = vlog2.pop %v67
    %v78 = vmul.f32 %v77, 0.6931472
    %v79 = vlog2.pop %v68
    %v80 = vmul.f32 %v79, 0.6931472
    %v81 = vmax.f32 %v74, -100.0
    %v82 = vmax.f32 %v76, -100.0
    %v83 = vmax.f32 %v78, -100.0
    %v84 = vmax.f32 %v80, -100.0
    %v85 = vsub.f32 0.0, %v65
    %v86 = vsub.f32 0.0, %v66
    %v87 = vsub.f32 0.0, %v67
    %v88 = vsub.f32 0.0, %v68
    %v89 = vadd.f32 %v85, 1.0
    %v90 = vlog2.pop %v89
    %v91 = vmul.f32 %v90, 0.6931472
    %v92 = vmul.f32 -0.5, %v85
    %v93 = vadd.f32 %v92, 1.0
    %v94 = vmul.f32 %v93, %v85
    %v95 = vand.u32 2147483647, %v85
    %vm96 = vcmp.lt.f32.partialorder %v95, 0.0004427343
    %v97 = vsel %vm96, %v94, %v91
    %v98 = vadd.f32 %v86, 1.0
    %v99 = vlog2.pop %v98
    %v100 = vmul.f32 %v99, 0.6931472
    %v101 = vmul.f32 -0.5, %v86
    %v102 = vadd.f32 %v101, 1.0
    %v103 = vmul.f32 %v102, %v86
    %v104 = vand.u32 2147483647, %v86
    %vm105 = vcmp.lt.f32.partialorder %v104, 0.0004427343
    %v106 = vsel %vm105, %v103, %v100
    %v107 = vadd.f32 %v87, 1.0
    %v108 = vlog2.pop %v107
    %v109 = vmul.f32 %v108, 0.6931472
    %v110 = vmul.f32 -0.5, %v87
    %v111 = vadd.f32 %v110, 1.0
    %v112 = vmul.f32 %v111, %v87
    %v113 = vand.u32 2147483647, %v87
    %vm114 = vcmp.lt.f32.partialorder %v113, 0.0004427343
    %v115 = vsel %vm114, %v112, %v109
    %v116 = vadd.f32 %v88, 1.0
    %v117 = vlog2.pop %v116
    %v118 = vmul.f32 %v117, 0.6931472
    %v119 = vmul.f32 -0.5, %v88
    %v120 = vadd.f32 %v119, 1.0
    %v121 = vmul.f32 %v120, %v88
    %v122 = vand.u32 2147483647, %v88
    %vm123 = vcmp.lt.f32.partialorder %v122, 0.0004427343
    %v124 = vsel %vm123, %v121, %v118
    %v125 = vmax.f32 %v97, -100.0
    %v126 = vmax.f32 %v106, -100.0
    %v127 = vmax.f32 %v115, -100.0
    %v128 = vmax.f32 %v124, -100.0
    %v129 = vsub.f32 %v81, %v125
    %v130 = vsub.f32 %v82, %v126
    %v131 = vsub.f32 %v83, %v127
    %v132 = vsub.f32 %v84, %v128
    %v133 = vmul.f32 %v69, %v129
    %v134 = vmul.f32 %v70, %v130
    %v135 = vmul.f32 %v71, %v131
    %v136 = vmul.f32 %v72, %v132
    %v137 = vadd.f32 %v125, %v133
    %v138 = vadd.f32 %v126, %v134
    %v139 = vadd.f32 %v127, %v135
    %v140 = vadd.f32 %v128, %v136
    %s141 = sadd.s32 0, 0
    %s142 = smul.u32 %s141, 32
    %s143 = sadd.s32 %s142, 32
    %p144 = scmp.gt.s32.totalorder %s143, 32
    // Predicated region
    $region22: #{tpu_custom_call.1} parent=1 // pred_check
      %p145 = pneg %p144
    $region23: #{tpu_custom_call.1} parent=1 // pred_check_branch
      %147 = sbr.rel (%p145) target = $region25
    $region24: #{tpu_custom_call.1} parent=1 // pred_region
      %v148 = vlaneseq
      %v149 = vshrl.u32 %v148, 7
      %v150 = vadd.s32 %v149, 8
      %v151 = vadd.s32 %v149, 16
      %v152 = vadd.s32 %v149, 24
      %v153 = vstv %s142
      %v154 = vadd.s32 %v153, %v149
      %v155 = vadd.s32 %v153, %v150
      %v156 = vadd.s32 %v153, %v151
      %v157 = vadd.s32 %v153, %v152
      %vm158 = vcmp.lt.s32.totalorder %v154, 32
      %vm159 = vcmp.lt.s32.totalorder %v155, 32
      %vm160 = vcmp.lt.s32.totalorder %v156, 32
      %vm161 = vcmp.lt.s32.totalorder %v157, 32
      %v162 = vsel %vm158, %v137, 0.0
      %v163 = vsel %vm159, %v138, 0.0
      %v164 = vsel %vm160, %v139, 0.0
      %v165 = vsel %vm161, %v140, 0.0
      %v166 = vld [vmem:[#allocation7] sm:$0xff]
      %v167 = vadd.f32 %v162, %v163
      %v168 = vadd.f32 %v167, %v164
      %v169 = vadd.f32 %v168, %v165
      %v170 = vadd.f32 %v166, %v169
      %171 = vst [vmem:[#allocation7] sm:$0xff] %v170
    $region25: #{tpu_custom_call.1} parent=1 // pred_fallthru
      _
    %p172 = scmp.le.s32.totalorder %s143, 32
    // Predicated region
    $region26: #{tpu_custom_call.1} parent=1 // pred_check
      %p173 = pneg %p172
    $region27: #{tpu_custom_call.1} parent=1 // pred_check_branch
      %175 = sbr.rel (%p173) target = $region29
    $region28: #{tpu_custom_call.1} parent=1 // pred_region
      %v176 = vld [vmem:[#allocation7] sm:$0xff]
      %v177 = vadd.f32 %v137, %v138
      %v178 = vadd.f32 %v177, %v139
      %v179 = vadd.f32 %v178, %v140
      %v180 = vadd.f32 %v176, %v179
      %181 = vst [vmem:[#allocation7] sm:$0xff] %v180
    $region29: #{tpu_custom_call.1} parent=1 // pred_fallthru
      _
    // Predicated region
    $region30: #{tpu_custom_call.1} parent=1 // pred_check
      _
    $region31: #{tpu_custom_call.1} parent=1 // pred_check_branch
      %183 = sbr.rel (0) target = $region33
    $region32: #{tpu_custom_call.1} parent=1 // pred_region
      %s185 = ssub.s32 128, 128
      %186 = vsyncadd [#allocation4], %s185
      %s188 = sshll.u32 [#allocation7], 4
      %s189 = int_to_ptr.vmem [resolvable:$true] %s188
      %191 = dma.vmem_to_hbm [thread:$0]  %s189, 128, %s2, [#allocation4]
    $region33: #{tpu_custom_call.1} parent=1 // pred_fallthru
      _
    // Predicated region
    $region34: #{tpu_custom_call.1} parent=1 // pred_check
      _
    $region35: #{tpu_custom_call.1} parent=1 // pred_check_branch
      %193 = sbr.rel (0) target = $region37
    $region36: #{tpu_custom_call.1} parent=1 // pred_region
      %194 = dma.done [#allocation4], 128
    $region37: #{tpu_custom_call.1} parent=1 // pred_fallthru
      _
    %195 = vsyncpa [#allocation3], 1
    %196 = vsyncpa [#allocation6], 1
    %197 = vsyncpa [#allocation4], 1

</llo_original>
